<compile_context>
chip_gen: v7x
topology: tpu7x:2x2x1
jax: 0.10.0
libtpu: 0.0.40
codegen_flags: <defaults>
</compile_context>

<pallas_src>
import functools

import jax
import jax.numpy as jnp
from jax.experimental import pallas as pl
from jax.experimental.pallas import tpu as pltpu


def _round_up(x, m):
    return (x + m - 1) // m * m


# ---------------------------------------------------------------------------
# Kernel body
# ---------------------------------------------------------------------------
def _self_output_kernel(x_ref, w_ref, scale_ref, b_ref, res_ref, g_ref, beta_ref, o_ref,
                        *, eps, inv_h):
    # x_ref:    (tm, Din)   activation tile (any float dtype; cast to bf16 for the MXU here)
    # w_ref:    (Din, Dout) quantized weight levels, resident across the grid
    # scale_ref:(1, 1)      f32 dequantization scale (SMEM in the optimized spec set)
    # b_ref:    (1, Dout)   f32 dense bias
    # res_ref:  (tm, Dout)  residual tile, streamed at caller dtype, upcast for LN math
    # g_ref:    (1, Dout)   f32 LayerNorm gamma
    # beta_ref: (1, Dout)   f32 LayerNorm beta
    # o_ref:    (tm, Dout)  output tile (bf16 by default)
    x = x_ref[...].astype(jnp.bfloat16)          # in-kernel cast: no separate XLA HBM pass
    acc = jnp.dot(x, w_ref[...], preferred_element_type=jnp.float32)
    y = acc * scale_ref[0, 0] + b_ref[...]
    # TODO(synk): nn.Dropout is identity in eval mode; training-mode dropout not emitted.
    y = y + res_ref[...].astype(jnp.float32)

    # Two-pass (centered) LayerNorm statistics in f32 for numerical stability.
    mean = jnp.sum(y, axis=-1, keepdims=True) * inv_h
    c = y - mean
    var = jnp.sum(c * c, axis=-1, keepdims=True) * inv_h
    normed = c * jax.lax.rsqrt(var + eps)
    o_ref[...] = (normed * g_ref[...] + beta_ref[...]).astype(o_ref.dtype)


# ---------------------------------------------------------------------------
# One-time weight quantization (hoist out of the per-forward hot path and cache)
# ---------------------------------------------------------------------------
def prepare_qbert_self_output_params(params, num_bits):
    """Quantize the QLinear weight ONCE; reuse the returned dict for every forward call."""
    # TODO(synk): QLinear's exact quantization scheme is not in the reference; a standard
    # symmetric per-tensor min-max fake-quant is used (num_bits <= 0 -> no quantization).
    w = params["w"]
    d_out = w.shape[-1]
    if num_bits is None or num_bits <= 0:
        levels = w.astype(jnp.float32)
        scale = jnp.ones((1, 1), jnp.float32)
    else:
        qmax = float(2 ** (num_bits - 1) - 1)
        scale = (jnp.maximum(jnp.max(jnp.abs(w)), 1e-8) / qmax).astype(jnp.float32)
        levels = jnp.round(w / scale)
        # bf16 holds integers exactly only up to 2**8 -> keep f32 levels for wider bit-widths.
        levels = levels.astype(jnp.bfloat16) if num_bits <= 9 else levels.astype(jnp.float32)
        scale = scale.reshape(1, 1)
    return {
        "w_levels": levels,                                     # (Din, Dout)
        "scale": scale.reshape(1, 1),                           # (1, 1) f32
        "b": params["b"].reshape(1, d_out).astype(jnp.float32),
        "gamma": params["gamma"].reshape(1, d_out).astype(jnp.float32),
        "beta": params["beta"].reshape(1, d_out).astype(jnp.float32),
    }


# ---------------------------------------------------------------------------
# Tiling / VMEM sizing
# ---------------------------------------------------------------------------
_VMEM_BUDGET = 28 * 1024 * 1024   # conservative: leaves headroom on v7x (64 MiB/TC) & scoped defaults


def _vmem_bytes(tm, d_in, d_out, x_bytes, r_bytes, o_bytes, w_bytes, w_buffers):
    return (2 * tm * d_in * x_bytes               # x tiles (double-buffered)
            + 2 * tm * d_out * r_bytes            # residual tiles
            + 2 * tm * d_out * o_bytes            # output tiles
            + w_buffers * d_in * d_out * w_bytes  # resident weight levels
            + 2 * 3 * d_out * 4                   # bias / gamma / beta
            + 4 * tm * d_out * 4)                 # f32 y / centered / normed temporaries


def _choose_row_tile(rows, tm_req, d_in, d_out, x_bytes, r_bytes, o_bytes, w_bytes):
    """Pick a row tile (multiple of 16 for bf16 sublane packing) that fits VMEM and, when
    possible, divides rows exactly so no host-side padding copy is needed."""
    tm = max(16, _round_up(min(tm_req, _round_up(rows, 16)), 16))
    while tm > 16 and _vmem_bytes(tm, d_in, d_out, x_bytes, r_bytes, o_bytes, w_bytes, 2) > _VMEM_BUDGET:
        tm = max(16, (tm // 2) // 16 * 16)
    if rows % tm == 0:
        return tm, 0
    # Prefer the largest multiple-of-16 divisor of rows (no padding at all).
    for t in range(tm - 16, 15, -16):
        if rows % t == 0 and (t >= tm // 2 or t >= 256):
            return t, 0
    # Rare fallback: pad the row dimension up to a tile multiple (results are sliced off).
    return tm, _round_up(rows, tm) - rows


# ---------------------------------------------------------------------------
# pallas_call builder
# ---------------------------------------------------------------------------
def _pallas_self_output(x2, q, r2, *, padded_rows, tm, d_in, d_out, eps, out_dtype, optimized):
    n_tiles = padded_rows // tm
    kernel = functools.partial(_self_output_kernel, eps=eps, inv_h=1.0 / d_out)

    w_levels = q["w_levels"]
    w_bytes = jnp.dtype(w_levels.dtype).itemsize
    o_bytes = jnp.dtype(out_dtype).itemsize

    def const_spec(shape):
        # Grid-invariant operands (constant index_map): with the optimized spec set they are
        # single-buffered, halving the resident weight footprint (matters on v7x's 64 MiB VMEM).
        if optimized:
            return pl.BlockSpec(shape, lambda i: (0, 0), pipeline_mode=pl.Buffered(1))
        return pl.BlockSpec(shape, lambda i: (0, 0))

    if optimized:
        scale_spec = pl.BlockSpec(memory_space=pltpu.MemorySpace.SMEM)   # (1,1) scalar in SMEM
    else:
        scale_spec = pl.BlockSpec((1, 1), lambda i: (0, 0))              # proven VMEM fallback

    w_buffers = 1 if optimized else 2
    vmem_need = _vmem_bytes(tm, d_in, d_out, x2.dtype.itemsize, r2.dtype.itemsize,
                            o_bytes, w_bytes, w_buffers)
    vmem_limit = int(min(max(vmem_need + vmem_need // 4 + (2 << 20), 16 << 20), 32 << 20))

    cost = pl.CostEstimate(
        flops=2 * padded_rows * d_in * d_out,
        transcendentals=padded_rows,                       # one rsqrt per row
        bytes_accessed=(padded_rows * d_in * x2.dtype.itemsize
                        + padded_rows * d_out * (r2.dtype.itemsize + o_bytes)
                        + d_in * d_out * w_bytes
                        + 3 * d_out * 4 + 4))

    return pl.pallas_call(
        kernel,
        out_shape=jax.ShapeDtypeStruct((padded_rows, d_out), out_dtype),
        grid_spec=pltpu.PrefetchScalarGridSpec(
            num_scalar_prefetch=0,
            grid=(n_tiles,),
            in_specs=[
                pl.BlockSpec((tm, d_in), lambda i: (i, 0)),     # activation tile
                const_spec((d_in, d_out)),                      # weight levels (resident)
                scale_spec,                                     # dequant scale
                const_spec((1, d_out)),                         # bias
                pl.BlockSpec((tm, d_out), lambda i: (i, 0)),    # residual tile
                const_spec((1, d_out)),                         # gamma
                const_spec((1, d_out)),                         # beta
            ],
            out_specs=pl.BlockSpec((tm, d_out), lambda i: (i, 0)),
        ),
        compiler_params=pltpu.CompilerParams(
            # Row axis is embarrassingly parallel: shards across TCs on v7x; no-op on v5e (1 TC).
            dimension_semantics=("parallel",),
            vmem_limit_bytes=vmem_limit),
        cost_estimate=cost,
    )(x2, w_levels, q["scale"], q["b"], r2, q["gamma"], q["beta"])


# Flipped off at runtime if this JAX/Mosaic build rejects pl.Buffered(1) / the SMEM scale spec.
_USE_OPTIMIZED_SPECS = True


def qbert_self_output(hidden_states, input_tensor, prepared, num_grad_bits=None, *,
                      eps=1e-12, tm=512, out_dtype=jnp.bfloat16):
    """Forward of QBertSelfOutput / QBertOutput:
       LayerNorm(QLinear(hidden_states) [Dropout is identity in eval] + input_tensor).

    `prepared` comes from prepare_qbert_self_output_params (quantize the weight once, reuse).
    `num_grad_bits` only affects the backward pass and is unused in the forward.
    """
    global _USE_OPTIMIZED_SPECS
    del num_grad_bits
    B, S, d_in = hidden_states.shape
    d_out = input_tensor.shape[-1]
    rows = B * S

    # No wrapper-side astype: the kernel casts activations to bf16 itself and upcasts the
    # residual to f32 for the LayerNorm math (stream bf16 end-to-end for best bandwidth).
    x2 = hidden_states.reshape(rows, d_in)
    r2 = input_tensor.reshape(rows, d_out)

    tm, pad = _choose_row_tile(rows, tm, d_in, d_out,
                               x2.dtype.itemsize, r2.dtype.itemsize,
                               jnp.dtype(out_dtype).itemsize,
                               jnp.dtype(prepared["w_levels"].dtype).itemsize)
    if pad:  # rare fallback for row counts with no usable multiple-of-16 divisor
        x2 = jnp.pad(x2, ((0, pad), (0, 0)))
        r2 = jnp.pad(r2, ((0, pad), (0, 0)))
    padded_rows = rows + pad

    call = functools.partial(_pallas_self_output, padded_rows=padded_rows, tm=tm,
                             d_in=d_in, d_out=d_out, eps=eps, out_dtype=out_dtype)
    if _USE_OPTIMIZED_SPECS:
        try:
            out = call(x2, prepared, r2, optimized=True)
        except Exception:
            # This build rejected single-buffered constants / the SMEM scalar spec; fall back to
            # the previously proven all-VMEM, double-buffered configuration (identical results).
            _USE_OPTIMIZED_SPECS = False
            out = call(x2, prepared, r2, optimized=False)
    else:
        out = call(x2, prepared, r2, optimized=False)

    if pad:
        out = out[:rows]
    return out.reshape(B, S, d_out)


# ---------------------------------------------------------------------------
# Pure-JAX reference mirroring the kernel numerics (bf16 activations, f32 accum/LN)
# ---------------------------------------------------------------------------
def reference(hidden_states, input_tensor, prepared, eps=1e-12):
    d_in = hidden_states.shape[-1]
    d_out = prepared["b"].shape[-1]
    x = hidden_states.astype(jnp.bfloat16).reshape(-1, d_in)
    y = jnp.dot(x, prepared["w_levels"], preferred_element_type=jnp.float32)
    y = y * prepared["scale"][0, 0] + prepared["b"][0]
    y = y.reshape(hidden_states.shape[:-1] + (d_out,))
    y = y + input_tensor.astype(jnp.float32)
    mean = jnp.mean(y, axis=-1, keepdims=True)
    var = jnp.mean((y - mean) ** 2, axis=-1, keepdims=True)
    out = (y - mean) * jax.lax.rsqrt(var + eps)
    return out * prepared["gamma"][0] + prepared["beta"][0]


if __name__ == "__main__":
    num_bits, num_grad_bits = 8, 8
    key = jax.random.PRNGKey(0)

    def make_case(key, B, S, d_in, d_out, act_dtype):
        k1, k2, k3, k4, k5, k6 = jax.random.split(key, 6)
        hidden_states = jax.random.normal(k1, (B, S, d_in), dtype=jnp.float32).astype(act_dtype)
        input_tensor = jax.random.normal(k2, (B, S, d_out), dtype=jnp.float32).astype(act_dtype)
        params = {
            # Stored as (in, out) so the kernel computes x @ W (== PyTorch x @ weight.T).
            "w": jax.random.normal(k3, (d_in, d_out), dtype=jnp.float32) * 0.02,
            "b": jax.random.normal(k4, (d_out,), dtype=jnp.float32) * 0.02,
            "gamma": 1.0 + 0.1 * jax.random.normal(k5, (d_out,), dtype=jnp.float32),
            "beta": 0.1 * jax.random.normal(k6, (d_out,), dtype=jnp.float32),
        }
        return hidden_states, input_tensor, params

    def check(name, hs, it, params, **kw):
        prepared = prepare_qbert_self_output_params(params, num_bits)   # quantize ONCE, reuse
        out = qbert_self_output(hs, it, prepared, num_grad_bits, **kw)
        out = jax.block_until_ready(out)
        ref = reference(hs, it, prepared)
        assert out.shape == it.shape, name
        assert out.dtype == kw.get("out_dtype", jnp.bfloat16), name
        ok = jnp.allclose(out.astype(jnp.float32), ref, atol=3e-2, rtol=3e-2)
        assert bool(ok), f"mismatch vs pure-JAX reference ({name})"

    keys = jax.random.split(key, 3)

    # Case 1: small QBertSelfOutput-like shape (batch=2, seq=8, hidden=32), f32 activations.
    hs, it, params = make_case(keys[0], B=2, S=8, d_in=32, d_out=32, act_dtype=jnp.float32)
    check("case1", hs, it, params)

    # Case 2: QBertOutput-like (d_in != d_out), bf16 activations end-to-end, multi-tile grid.
    hs, it, params = make_case(keys[1], B=2, S=40, d_in=128, d_out=64, act_dtype=jnp.bfloat16)
    check("case2", hs, it, params, tm=32)

    # Case 3: awkward row count -> exercises the padded-tail fallback; f32 output requested.
    hs, it, params = make_case(keys[2], B=2, S=5, d_in=64, d_out=64, act_dtype=jnp.float32)
    check("case3", hs, it, params, out_dtype=jnp.float32)

    print("KERNEL_OK")
</pallas_src>

<mosaic_0001>
module attributes {stable_mosaic.version = 11 : i64} {
  func.func @_self_output_kernel(%arg0: i32, %arg1: memref<16x32xf32, #tpu.memory_space<vmem>>, %arg2: memref<32x32xbf16, #tpu.memory_space<vmem>>, %arg3: memref<1x1xf32, #tpu.memory_space<smem>>, %arg4: memref<1x32xf32, #tpu.memory_space<vmem>>, %arg5: memref<16x32xf32, #tpu.memory_space<vmem>>, %arg6: memref<1x32xf32, #tpu.memory_space<vmem>>, %arg7: memref<1x32xf32, #tpu.memory_space<vmem>>, %arg8: memref<16x32xbf16, #tpu.memory_space<vmem>>) attributes {dimension_semantics = [#tpu.dimension_semantics<parallel>], iteration_bounds = array<i64: 1>, scalar_prefetch = 0 : i64, scratch_operands = 0 : i64, tpu.core_type = #tpu.core_type<tc>, window_params = [{transform_indices = @transform_0, window_bounds = array<i64: 16, 32>}, {pipeline_mode = #tpu.pipeline_mode<synchronous>, transform_indices = @transform_1, window_bounds = array<i64: 32, 32>}, {transform_indices = @transform_2, window_bounds = array<i64: 1, 1>}, {pipeline_mode = #tpu.pipeline_mode<synchronous>, transform_indices = @transform_3, window_bounds = array<i64: 1, 32>}, {transform_indices = @transform_4, window_bounds = array<i64: 16, 32>}, {pipeline_mode = #tpu.pipeline_mode<synchronous>, transform_indices = @transform_5, window_bounds = array<i64: 1, 32>}, {pipeline_mode = #tpu.pipeline_mode<synchronous>, transform_indices = @transform_6, window_bounds = array<i64: 1, 32>}, {transform_indices = @transform_7, window_bounds = array<i64: 16, 32>}]} {
    %c0 = arith.constant 0 : index
    %c0_0 = arith.constant 0 : index
    %0 = vector.load %arg1[%c0, %c0_0] : memref<16x32xf32, #tpu.memory_space<vmem>>, vector<16x32xf32>
    %1 = arith.truncf %0 : vector<16x32xf32> to vector<16x32xbf16>
    %c0_1 = arith.constant 0 : index
    %c0_2 = arith.constant 0 : index
    %2 = vector.load %arg2[%c0_1, %c0_2] : memref<32x32xbf16, #tpu.memory_space<vmem>>, vector<32x32xbf16>
    %cst = arith.constant dense<0.000000e+00> : vector<16x32xf32>
    %3 = tpu.matmul %1, %2, %cst {dimension_numbers = #tpu.dot_dimension_numbers<[1], [0], [0], [1], [0, 0, 1, 1], [], []>} : vector<16x32xbf16>, vector<32x32xbf16>, vector<16x32xf32> -> vector<16x32xf32>
    %c0_3 = arith.constant 0 : index
    %c0_4 = arith.constant 0 : index
    %4 = memref.load %arg3[%c0_3, %c0_4] : memref<1x1xf32, #tpu.memory_space<smem>>
    %5 = vector.broadcast %4 : f32 to vector<16x32xf32>
    %6 = arith.mulf %3, %5 : vector<16x32xf32>
    %c0_5 = arith.constant 0 : index
    %c0_6 = arith.constant 0 : index
    %7 = vector.load %arg4[%c0_5, %c0_6] : memref<1x32xf32, #tpu.memory_space<vmem>>, vector<1x32xf32>
    %8 = vector.broadcast %7 : vector<1x32xf32> to vector<16x32xf32>
    %9 = arith.addf %6, %8 : vector<16x32xf32>
    %c0_7 = arith.constant 0 : index
    %c0_8 = arith.constant 0 : index
    %10 = vector.load %arg5[%c0_7, %c0_8] : memref<16x32xf32, #tpu.memory_space<vmem>>, vector<16x32xf32>
    %11 = arith.addf %9, %10 : vector<16x32xf32>
    %cst_9 = arith.constant dense<0.000000e+00> : vector<16xf32>
    %12 = vector.multi_reduction <add>, %11, %cst_9 [1] : vector<16x32xf32> to vector<16xf32>
    %13 = vector.shape_cast %12 : vector<16xf32> to vector<16x1xf32>
    %cst_10 = arith.constant 3.125000e-02 : f32
    %14 = vector.broadcast %cst_10 : f32 to vector<16x1xf32>
    %15 = arith.mulf %13, %14 : vector<16x1xf32>
    %16 = vector.broadcast %15 : vector<16x1xf32> to vector<16x32xf32>
    %17 = arith.subf %11, %16 : vector<16x32xf32>
    %18 = arith.mulf %17, %17 : vector<16x32xf32>
    %cst_11 = arith.constant dense<0.000000e+00> : vector<16xf32>
    %19 = vector.multi_reduction <add>, %18, %cst_11 [1] : vector<16x32xf32> to vector<16xf32>
    %20 = vector.shape_cast %19 : vector<16xf32> to vector<16x1xf32>
    %cst_12 = arith.constant 3.125000e-02 : f32
    %21 = vector.broadcast %cst_12 : f32 to vector<16x1xf32>
    %22 = arith.mulf %20, %21 : vector<16x1xf32>
    %cst_13 = arith.constant 9.99999996E-13 : f32
    %23 = vector.broadcast %cst_13 : f32 to vector<16x1xf32>
    %24 = arith.addf %22, %23 : vector<16x1xf32>
    %25 = math.rsqrt %24 : vector<16x1xf32>
    %26 = vector.broadcast %25 : vector<16x1xf32> to vector<16x32xf32>
    %27 = arith.mulf %17, %26 : vector<16x32xf32>
    %c0_14 = arith.constant 0 : index
    %c0_15 = arith.constant 0 : index
    %28 = vector.load %arg6[%c0_14, %c0_15] : memref<1x32xf32, #tpu.memory_space<vmem>>, vector<1x32xf32>
    %29 = vector.broadcast %28 : vector<1x32xf32> to vector<16x32xf32>
    %30 = arith.mulf %27, %29 : vector<16x32xf32>
    %c0_16 = arith.constant 0 : index
    %c0_17 = arith.constant 0 : index
    %31 = vector.load %arg7[%c0_16, %c0_17] : memref<1x32xf32, #tpu.memory_space<vmem>>, vector<1x32xf32>
    %32 = vector.broadcast %31 : vector<1x32xf32> to vector<16x32xf32>
    %33 = arith.addf %30, %32 : vector<16x32xf32>
    %34 = arith.truncf %33 : vector<16x32xf32> to vector<16x32xbf16>
    %c0_18 = arith.constant 0 : index
    %c0_19 = arith.constant 0 : index
    %35 = vector.load %arg8[%c0_18, %c0_19] : memref<16x32xbf16, #tpu.memory_space<vmem>>, vector<16x32xbf16>
    tpu.vector_store %arg8[%c0_18, %c0_19], %34 {strides = array<i32>} : memref<16x32xbf16, #tpu.memory_space<vmem>>, vector<16x32xbf16>,
    return
  }
  func.func @transform_0(%arg0: i32) -> (i32, i32) {
    %c0_i32 = arith.constant 0 : i32
    %c0_i32_0 = arith.constant 0 : i32
    return %arg0, %c0_i32 : i32, i32
  }
  func.func @transform_1(%arg0: i32) -> (i32, i32) {
    %c0_i32 = arith.constant 0 : i32
    %c0_i32_0 = arith.constant 0 : i32
    %c0_i32_1 = arith.constant 0 : i32
    return %c0_i32, %c0_i32_0 : i32, i32
  }
  func.func @transform_2(%arg0: i32) -> (i32, i32) {
    %c0_i32 = arith.constant 0 : i32
    %c0_i32_0 = arith.constant 0 : i32
    %c0_i32_1 = arith.constant 0 : i32
    return %c0_i32, %c0_i32_0 : i32, i32
  }
  func.func @transform_3(%arg0: i32) -> (i32, i32) {
    %c0_i32 = arith.constant 0 : i32
    %c0_i32_0 = arith.constant 0 : i32
    %c0_i32_1 = arith.constant 0 : i32
    return %c0_i32, %c0_i32_0 : i32, i32
  }
  func.func @transform_4(%arg0: i32) -> (i32, i32) {
    %c0_i32 = arith.constant 0 : i32
    %c0_i32_0 = arith.constant 0 : i32
    return %arg0, %c0_i32 : i32, i32
  }
  func.func @transform_5(%arg0: i32) -> (i32, i32) {
    %c0_i32 = arith.constant 0 : i32
    %c0_i32_0 = arith.constant 0 : i32
    %c0_i32_1 = arith.constant 0 : i32
    return %c0_i32, %c0_i32_0 : i32, i32
  }
  func.func @transform_6(%arg0: i32) -> (i32, i32) {
    %c0_i32 = arith.constant 0 : i32
    %c0_i32_0 = arith.constant 0 : i32
    %c0_i32_1 = arith.constant 0 : i32
    return %c0_i32, %c0_i32_0 : i32, i32
  }
  func.func @transform_7(%arg0: i32) -> (i32, i32) {
    %c0_i32 = arith.constant 0 : i32
    %c0_i32_0 = arith.constant 0 : i32
    return %arg0, %c0_i32 : i32, i32
  }
}

module attributes {stable_mosaic.version = 11 : i64} {
  func.func @_self_output_kernel(%arg0: i32, %arg1: memref<16x32xf32, #tpu.memory_space<vmem>>, %arg2: memref<32x32xbf16, #tpu.memory_space<vmem>>, %arg3: memref<1x1xf32, #tpu.memory_space<vmem>>, %arg4: memref<1x32xf32, #tpu.memory_space<vmem>>, %arg5: memref<16x32xf32, #tpu.memory_space<vmem>>, %arg6: memref<1x32xf32, #tpu.memory_space<vmem>>, %arg7: memref<1x32xf32, #tpu.memory_space<vmem>>, %arg8: memref<16x32xbf16, #tpu.memory_space<vmem>>) attributes {dimension_semantics = [#tpu.dimension_semantics<parallel>], iteration_bounds = array<i64: 1>, scalar_prefetch = 0 : i64, scratch_operands = 0 : i64, tpu.core_type = #tpu.core_type<tc>, window_params = [{transform_indices = @transform_0, window_bounds = array<i64: 16, 32>}, {pipeline_mode = #tpu.pipeline_mode<synchronous>, transform_indices = @transform_1, window_bounds = array<i64: 32, 32>}, {pipeline_mode = #tpu.pipeline_mode<synchronous>, transform_indices = @transform_2, window_bounds = array<i64: 1, 1>}, {pipeline_mode = #tpu.pipeline_mode<synchronous>, transform_indices = @transform_3, window_bounds = array<i64: 1, 32>}, {transform_indices = @transform_4, window_bounds = array<i64: 16, 32>}, {pipeline_mode = #tpu.pipeline_mode<synchronous>, transform_indices = @transform_5, window_bounds = array<i64: 1, 32>}, {pipeline_mode = #tpu.pipeline_mode<synchronous>, transform_indices = @transform_6, window_bounds = array<i64: 1, 32>}, {transform_indices = @transform_7, window_bounds = array<i64: 16, 32>}]} {
    %c0 = arith.constant 0 : index
    %c0_0 = arith.constant 0 : index
    %0 = vector.load %arg1[%c0, %c0_0] : memref<16x32xf32, #tpu.memory_space<vmem>>, vector<16x32xf32>
    %1 = arith.truncf %0 : vector<16x32xf32> to vector<16x32xbf16>
    %c0_1 = arith.constant 0 : index
    %c0_2 = arith.constant 0 : index
    %2 = vector.load %arg2[%c0_1, %c0_2] : memref<32x32xbf16, #tpu.memory_space<vmem>>, vector<32x32xbf16>
    %cst = arith.constant dense<0.000000e+00> : vector<16x32xf32>
    %3 = tpu.matmul %1, %2, %cst {dimension_numbers = #tpu.dot_dimension_numbers<[1], [0], [0], [1], [0, 0, 1, 1], [], []>} : vector<16x32xbf16>, vector<32x32xbf16>, vector<16x32xf32> -> vector<16x32xf32>
    %c0_3 = arith.constant 0 : index
    %c0_4 = arith.constant 0 : index
    %4 = vector.load %arg3[%c0_3, %c0_4] : memref<1x1xf32, #tpu.memory_space<vmem>>, vector<1x1xf32>
    %5 = vector.extract %4[0, 0] : f32 from vector<1x1xf32>
    %6 = vector.broadcast %5 : f32 to vector<16x32xf32>
    %7 = arith.mulf %3, %6 : vector<16x32xf32>
    %c0_5 = arith.constant 0 : index
    %c0_6 = arith.constant 0 : index
    %8 = vector.load %arg4[%c0_5, %c0_6] : memref<1x32xf32, #tpu.memory_space<vmem>>, vector<1x32xf32>
    %9 = vector.broadcast %8 : vector<1x32xf32> to vector<16x32xf32>
    %10 = arith.addf %7, %9 : vector<16x32xf32>
    %c0_7 = arith.constant 0 : index
    %c0_8 = arith.constant 0 : index
    %11 = vector.load %arg5[%c0_7, %c0_8] : memref<16x32xf32, #tpu.memory_space<vmem>>, vector<16x32xf32>
    %12 = arith.addf %10, %11 : vector<16x32xf32>
    %cst_9 = arith.constant dense<0.000000e+00> : vector<16xf32>
    %13 = vector.multi_reduction <add>, %12, %cst_9 [1] : vector<16x32xf32> to vector<16xf32>
    %14 = vector.shape_cast %13 : vector<16xf32> to vector<16x1xf32>
    %cst_10 = arith.constant 3.125000e-02 : f32
    %15 = vector.broadcast %cst_10 : f32 to vector<16x1xf32>
    %16 = arith.mulf %14, %15 : vector<16x1xf32>
    %17 = vector.broadcast %16 : vector<16x1xf32> to vector<16x32xf32>
    %18 = arith.subf %12, %17 : vector<16x32xf32>
    %19 = arith.mulf %18, %18 : vector<16x32xf32>
    %cst_11 = arith.constant dense<0.000000e+00> : vector<16xf32>
    %20 = vector.multi_reduction <add>, %19, %cst_11 [1] : vector<16x32xf32> to vector<16xf32>
    %21 = vector.shape_cast %20 : vector<16xf32> to vector<16x1xf32>
    %cst_12 = arith.constant 3.125000e-02 : f32
    %22 = vector.broadcast %cst_12 : f32 to vector<16x1xf32>
    %23 = arith.mulf %21, %22 : vector<16x1xf32>
    %cst_13 = arith.constant 9.99999996E-13 : f32
    %24 = vector.broadcast %cst_13 : f32 to vector<16x1xf32>
    %25 = arith.addf %23, %24 : vector<16x1xf32>
    %26 = math.rsqrt %25 : vector<16x1xf32>
    %27 = vector.broadcast %26 : vector<16x1xf32> to vector<16x32xf32>
    %28 = arith.mulf %18, %27 : vector<16x32xf32>
    %c0_14 = arith.constant 0 : index
    %c0_15 = arith.constant 0 : index
    %29 = vector.load %arg6[%c0_14, %c0_15] : memref<1x32xf32, #tpu.memory_space<vmem>>, vector<1x32xf32>
    %30 = vector.broadcast %29 : vector<1x32xf32> to vector<16x32xf32>
    %31 = arith.mulf %28, %30 : vector<16x32xf32>
    %c0_16 = arith.constant 0 : index
    %c0_17 = arith.constant 0 : index
    %32 = vector.load %arg7[%c0_16, %c0_17] : memref<1x32xf32, #tpu.memory_space<vmem>>, vector<1x32xf32>
    %33 = vector.broadcast %32 : vector<1x32xf32> to vector<16x32xf32>
    %34 = arith.addf %31, %33 : vector<16x32xf32>
    %35 = arith.truncf %34 : vector<16x32xf32> to vector<16x32xbf16>
    %c0_18 = arith.constant 0 : index
    %c0_19 = arith.constant 0 : index
    %36 = vector.load %arg8[%c0_18, %c0_19] : memref<16x32xbf16, #tpu.memory_space<vmem>>, vector<16x32xbf16>
    tpu.vector_store %arg8[%c0_18, %c0_19], %35 {strides = array<i32>} : memref<16x32xbf16, #tpu.memory_space<vmem>>, vector<16x32xbf16>,
    return
  }
  func.func @transform_0(%arg0: i32) -> (i32, i32) {
    %c0_i32 = arith.constant 0 : i32
    %c0_i32_0 = arith.constant 0 : i32
    return %arg0, %c0_i32 : i32, i32
  }
  func.func @transform_1(%arg0: i32) -> (i32, i32) {
    %c0_i32 = arith.constant 0 : i32
    %c0_i32_0 = arith.constant 0 : i32
    %c0_i32_1 = arith.constant 0 : i32
    return %c0_i32, %c0_i32_0 : i32, i32
  }
  func.func @transform_2(%arg0: i32) -> (i32, i32) {
    %c0_i32 = arith.constant 0 : i32
    %c0_i32_0 = arith.constant 0 : i32
    %c0_i32_1 = arith.constant 0 : i32
    return %c0_i32, %c0_i32_0 : i32, i32
  }
  func.func @transform_3(%arg0: i32) -> (i32, i32) {
    %c0_i32 = arith.constant 0 : i32
    %c0_i32_0 = arith.constant 0 : i32
    %c0_i32_1 = arith.constant 0 : i32
    return %c0_i32, %c0_i32_0 : i32, i32
  }
  func.func @transform_4(%arg0: i32) -> (i32, i32) {
    %c0_i32 = arith.constant 0 : i32
    %c0_i32_0 = arith.constant 0 : i32
    return %arg0, %c0_i32 : i32, i32
  }
  func.func @transform_5(%arg0: i32) -> (i32, i32) {
    %c0_i32 = arith.constant 0 : i32
    %c0_i32_0 = arith.constant 0 : i32
    %c0_i32_1 = arith.constant 0 : i32
    return %c0_i32, %c0_i32_0 : i32, i32
  }
  func.func @transform_6(%arg0: i32) -> (i32, i32) {
    %c0_i32 = arith.constant 0 : i32
    %c0_i32_0 = arith.constant 0 : i32
    %c0_i32_1 = arith.constant 0 : i32
    return %c0_i32, %c0_i32_0 : i32, i32
  }
  func.func @transform_7(%arg0: i32) -> (i32, i32) {
    %c0_i32 = arith.constant 0 : i32
    %c0_i32_0 = arith.constant 0 : i32
    return %arg0, %c0_i32 : i32, i32
  }
}

</mosaic_0001>

<llo_original>
// kernel: tpu_custom_call.1
$region0: #{tpu_custom_call.1}
  #allocation0 [shape = 'u32[]', space=smem, size = 0x4, offset = 0x4, fixed_abs, tag = 'smem constant byte address 0x4 - core index']
  #allocation1 [shape = 'u32[144,128]{1,0:T(1,128)}', space=vmem, size = 0x12000, scoped, tag = 'internal scratch']
  #allocation2 [shape = 'f32[1,1]{1,0:T(1,128)S(6)}', space=smem, size = 0x200, scoped, tag = 'scoped memory for tpu_custom_call.1']
  %s0 = inlined_call_operand.hbm [shape: f32[16,32], index: 0, kind: input, shape index: {}]
  %s1 = inlined_call_operand.hbm [shape: bf16[32,32], index: 1, kind: input, shape index: {}]
  %s2 = inlined_call_operand.<no memory space> [shape: f32[1,1], index: 2, kind: input, shape index: {}]
  %s3 = inlined_call_operand.vmem [shape: f32[1,32], index: 3, kind: input, shape index: {}]
  %s4 = inlined_call_operand.hbm [shape: f32[16,32], index: 4, kind: input, shape index: {}]
  %s5 = inlined_call_operand.vmem [shape: f32[1,32], index: 5, kind: input, shape index: {}]
  %s6 = inlined_call_operand.vmem [shape: f32[1,32], index: 6, kind: input, shape index: {}]
  %s7 = inlined_call_operand.hbm [shape: bf16[16,32], index: 7, kind: output, shape index: {}]
  %s8 = sld [smem:[#allocation0]]
  $region50: #{tpu_custom_call.1} parent=0
    _
  %s10 = ssub.s32 1, %s8
  %s11 = scalar_select 0, %s10, %s8
  %12 = sst [smem:[#allocation2]] %s2
  $region1: #{tpu_custom_call.1} parent=0
    #allocation3 [shape = 'u8[8192]{0}', space=vmem, size = 0x2000, scoped, tag = 'input window, operand 0, single buffered']
    #allocation4 [shape = 's32[1]{0}', space=sflag, size = 0x4, scoped, tag = 'scoped memory for tpu_custom_call.1']
    #allocation5 [shape = 's32[1]{0}', space=sflag, size = 0x4, scoped, tag = 'scoped memory for tpu_custom_call.1']
    #allocation6 [shape = 'u8[8192]{0}', space=vmem, size = 0x2000, scoped, tag = 'input window, operand 1, single buffered']
    #allocation7 [shape = 's32[1]{0}', space=sflag, size = 0x4, scoped, tag = 'scoped memory for tpu_custom_call.1']
    #allocation8 [shape = 'u8[8192]{0}', space=vmem, size = 0x2000, scoped, tag = 'input window, operand 4, single buffered']
    #allocation9 [shape = 'u8[4096]{0}', space=vmem, size = 0x1000, scoped, tag = 'output window, operand 0, single buffered']
    %13 = vsyncpa [#allocation4], 0
    %14 = vsyncpa [#allocation7], 0
    %15 = vsyncpa [#allocation5], 0
    // Predicated region
    $region2: #{tpu_custom_call.1} parent=1 // pred_check
      _
    $region3: #{tpu_custom_call.1} parent=1 // pred_check_branch
      %17 = sbr.rel (0) target = $region5
    $region4: #{tpu_custom_call.1} parent=1 // pred_region
      %s19 = ssub.s32 256, 256
      %20 = vsyncadd [#allocation4], %s19
      %s21 = sshll.u32 [#allocation3], 4
      %s22 = int_to_ptr.vmem [resolvable:$true] %s21
      %27 = dma.hbm_to_vmem [thread:$0]  %s0, 256, %s22, [#allocation4], 128, 128, 8
    $region5: #{tpu_custom_call.1} parent=1 // pred_fallthru
      _
    // Predicated region
    $region6: #{tpu_custom_call.1} parent=1 // pred_check
      _
    $region7: #{tpu_custom_call.1} parent=1 // pred_check_branch
      %29 = sbr.rel (0) target = $region9
    $region8: #{tpu_custom_call.1} parent=1 // pred_region
      %s31 = ssub.s32 256, 256
      %32 = vsyncadd [#allocation7], %s31
      %s33 = sshll.u32 [#allocation6], 4
      %s34 = int_to_ptr.vmem [resolvable:$true] %s33
      %39 = dma.hbm_to_vmem [thread:$0]  %s1, 256, %s34, [#allocation7], 64, 64, 4
    $region9: #{tpu_custom_call.1} parent=1 // pred_fallthru
      _
    // Predicated region
    $region10: #{tpu_custom_call.1} parent=1 // pred_check
      _
    $region11: #{tpu_custom_call.1} parent=1 // pred_check_branch
      %41 = sbr.rel (0) target = $region13
    $region12: #{tpu_custom_call.1} parent=1 // pred_region
      _
    $region13: #{tpu_custom_call.1} parent=1 // pred_fallthru
      _
    // Predicated region
    $region14: #{tpu_custom_call.1} parent=1 // pred_check
      _
    $region15: #{tpu_custom_call.1} parent=1 // pred_check_branch
      %43 = sbr.rel (0) target = $region17
    $region16: #{tpu_custom_call.1} parent=1 // pred_region
      _
    $region17: #{tpu_custom_call.1} parent=1 // pred_fallthru
      _
    // Predicated region
    $region18: #{tpu_custom_call.1} parent=1 // pred_check
      _
    $region19: #{tpu_custom_call.1} parent=1 // pred_check_branch
      %45 = sbr.rel (0) target = $region21
    $region20: #{tpu_custom_call.1} parent=1 // pred_region
      %s47 = ssub.s32 256, 256
      %48 = vsyncadd [#allocation7], %s47
      %s49 = sshll.u32 [#allocation8], 4
      %s50 = int_to_ptr.vmem [resolvable:$true] %s49
      %55 = dma.hbm_to_vmem [thread:$0]  %s4, 256, %s50, [#allocation7], 128, 128, 8
    $region21: #{tpu_custom_call.1} parent=1 // pred_fallthru
      _
    // Predicated region
    $region22: #{tpu_custom_call.1} parent=1 // pred_check
      _
    $region23: #{tpu_custom_call.1} parent=1 // pred_check_branch
      %57 = sbr.rel (0) target = $region25
    $region24: #{tpu_custom_call.1} parent=1 // pred_region
      _
    $region25: #{tpu_custom_call.1} parent=1 // pred_fallthru
      _
    // Predicated region
    $region26: #{tpu_custom_call.1} parent=1 // pred_check
      _
    $region27: #{tpu_custom_call.1} parent=1 // pred_check_branch
      %59 = sbr.rel (0) target = $region29
    $region28: #{tpu_custom_call.1} parent=1 // pred_region
      _
    $region29: #{tpu_custom_call.1} parent=1 // pred_fallthru
      _
    // Predicated region
    $region30: #{tpu_custom_call.1} parent=1 // pred_check
      _
    $region31: #{tpu_custom_call.1} parent=1 // pred_check_branch
      %61 = sbr.rel (0) target = $region33
    $region32: #{tpu_custom_call.1} parent=1 // pred_region
      %62 = dma.done [#allocation4], 256
    $region33: #{tpu_custom_call.1} parent=1 // pred_fallthru
      _
    // Predicated region
    $region34: #{tpu_custom_call.1} parent=1 // pred_check
      _
    $region35: #{tpu_custom_call.1} parent=1 // pred_check_branch
      %64 = sbr.rel (0) target = $region37
    $region36: #{tpu_custom_call.1} parent=1 // pred_region
      %65 = dma.done [#allocation7], 256
    $region37: #{tpu_custom_call.1} parent=1 // pred_fallthru
      _
    // Predicated region
    $region38: #{tpu_custom_call.1} parent=1 // pred_check
      _
    $region39: #{tpu_custom_call.1} parent=1 // pred_check_branch
      %67 = sbr.rel (0) target = $region41
    $region40: #{tpu_custom_call.1} parent=1 // pred_region
      %68 = dma.done [#allocation7], 256
    $region41: #{tpu_custom_call.1} parent=1 // pred_fallthru
      _
    %v70 = vld [vmem:[#allocation3] sm:$0xff]
    %v71 = vld [vmem:[#allocation3 + $0x8] sm:$0xff]
    %v72 = vpack.c.bf16 %v71, %v70
    %v73 = vld [vmem:[#allocation6] sm:$0xf]
    %v74 = vld [vmem:[#allocation6 + $0x4] sm:$0xf]
    %v75 = vld [vmem:[#allocation6 + $0x8] sm:$0xf]
    %v76 = vld [vmem:[#allocation6 + $0xc] sm:$0xf]
    %v81 = vunpack.c.l.b16 %v73
    %v82 = vunpack.c.l.b16 %v74
    %v83 = vunpack.c.l.b16 %v75
    %v84 = vunpack.c.l.b16 %v76
    %v85 = vpack.c.b16 %v82, %v81
    %v86 = vpack.c.b16 %v84, %v83
    %vm89 = vcmask 261120
    %v91 = vsel %vm89, %v72, 0
    %93 = vmatprep.subr.bf16.mxu0 0
    %94 = vmatpush1.bf16.msra.mxu0 %v85
    %95 = vmatprep.subr.bf16.mxu0 0
    %96 = vmatpush1.bf16.msra.mxu0 %v86
    %97 = vmatprep.subr.bf16.mxu0 0
    %98 = vmatpush1.bf16.msra.mxu0 0
    %99 = vmatprep.subr.bf16.mxu0 0
    %100 = vmatpush1.bf16.msra.mxu0 0
    %101 = vmatprep.subr.bf16.mxu0 0
    %102 = vmatpush1.bf16.msra.mxu0 0
    %103 = vmatprep.subr.bf16.mxu0 0
    %104 = vmatpush1.bf16.msra.mxu0 0
    %105 = vmatprep.subr.bf16.mxu0 0
    %106 = vmatpush1.bf16.msra.mxu0 0
    %107 = vmatprep.subr.bf16.mxu0 0
    %108 = vmatpush1.bf16.msra.mxu0 0
    %109 = vmatprep.subr.bf16.mxu0 0
    %110 = vmatpush1.bf16.msra.mxu0 0
    %111 = vmatprep.subr.bf16.mxu0 0
    %112 = vmatpush1.bf16.msra.mxu0 0
    %113 = vmatprep.subr.bf16.mxu0 0
    %114 = vmatpush1.bf16.msra.mxu0 0
    %115 = vmatprep.subr.bf16.mxu0 0
    %116 = vmatpush1.bf16.msra.mxu0 0
    %117 = vmatprep.subr.bf16.mxu0 0
    %118 = vmatpush1.bf16.msra.mxu0 0
    %119 = vmatprep.subr.bf16.mxu0 0
    %120 = vmatpush1.bf16.msra.mxu0 0
    %121 = vmatprep.subr.bf16.mxu0 0
    %122 = vmatpush1.bf16.msra.mxu0 0
    %123 = vmatprep.subr.bf16.mxu0 0
    %124 = vmatpush1.bf16.msra.mxu0 0
    %125 = vmatprep.mubr.bf16.mxu0 0
    %126 = vmatmul.mubr.bf16.gmra.mrb[0].mxu0 %v91
    %v127 = vpop.f32.mrb[0].mxu0
    %v128 = vadd.f32 0.0, %v127
    %v129 = vpop.f32.mrb[0].mxu0
    %v130 = vpop.f32.mrb[0].mxu0
    %v131 = vadd.f32 0.0, %v130
    %v132 = vpop.f32.mrb[0].mxu0
    %133 = vdwg.mxu0
    %s134 = sld [smem:[#allocation2]]
    %v135 = vstv %s134
    %v136 = vmul.f32 %v128, %v135
    %v137 = vmul.f32 %v131, %v135
    %v138 = vld [vmem:[%s3] sm:$0x1]
    %v140 = vlaneseq
    %v141 = vshrl.u32 %v140, 7
    %v142 = vsub.s32 0, %v141
    %v143 = vrot.slane %v138, %v142
    %v145 = vadd.f32 %v136, %v143
    %v146 = vadd.f32 %v137, %v143
    %v147 = vld [vmem:[#allocation8] sm:$0xff]
    %v148 = vld [vmem:[#allocation8 + $0x8] sm:$0xff]
    %v149 = vadd.f32 %v145, %v147
    %v150 = vadd.f32 %v146, %v148
    %v151 = vsel %vm89, %v149, 0.0
    %152 = vadd.xlane.f32.xlu0 %v151
    %v153 = vpop.xlane.xlu0 %152
    %v154 = vsel %vm89, %v150, 0.0
    %155 = vadd.xlane.f32.xlu0 %v154
    %v156 = vpop.xlane.xlu0 %155
    %v157 = vmul.f32 %v153, 0.03125
    %v158 = vmul.f32 %v156, 0.03125
    %v159 = vsub.f32 %v149, %v157
    %v160 = vsub.f32 %v150, %v158
    %v161 = vmul.f32 %v159, %v159
    %v162 = vmul.f32 %v160, %v160
    %v163 = vsel %vm89, %v161, 0.0
    %164 = vadd.xlane.f32.xlu0 %v163
    %v165 = vpop.xlane.xlu0 %164
    %v166 = vsel %vm89, %v162, 0.0
    %167 = vadd.xlane.f32.xlu0 %v166
    %v168 = vpop.xlane.xlu0 %167
    %v169 = vmul.f32 %v165, 0.03125
    %v170 = vmul.f32 %v168, 0.03125
    %v171 = vadd.f32 %v169, 1e-12
    %v172 = vadd.f32 %v170, 1e-12
    %v173 = vrsqrt.pop %v171
    %v174 = vrsqrt.pop %v172
    %v175 = vmul.f32 %v159, %v173
    %v176 = vmul.f32 %v160, %v174
    %v177 = vld [vmem:[%s5] sm:$0x1]
    %v179 = vlaneseq
    %v180 = vshrl.u32 %v179, 7
    %v181 = vsub.s32 0, %v180
    %v182 = vrot.slane %v177, %v181
    %v184 = vmul.f32 %v175, %v182
    %v185 = vmul.f32 %v176, %v182
    %v186 = vld [vmem:[%s6] sm:$0x1]
    %v188 = vlaneseq
    %v189 = vshrl.u32 %v188, 7
    %v190 = vsub.s32 0, %v189
    %v191 = vrot.slane %v186, %v190
    %v193 = vadd.f32 %v184, %v191
    %v194 = vadd.f32 %v185, %v191
    %v195 = vpack.c.bf16 %v194, %v193
    %v197 = vunpack.c.l.b16 %v195
    %v198 = vunpack.c.h.b16 %v195
    %v199 = vpack.c.b16 %v197, %v197
    %v200 = vpack.c.b16 %v198, %v198
    %vm203 = vcmask 257024
    %204 = vst.msk [vmem:[#allocation9] sm:$0xf] %vm203, %v199
    %205 = vst.msk [vmem:[#allocation9 + $0x4] sm:$0xf] %vm203, %v200
    // Predicated region
    $region42: #{tpu_custom_call.1} parent=1 // pred_check
      _
    $region43: #{tpu_custom_call.1} parent=1 // pred_check_branch
      %207 = sbr.rel (0) target = $region45
    $region44: #{tpu_custom_call.1} parent=1 // pred_region
      %s209 = ssub.s32 128, 128
      %210 = vsyncadd [#allocation5], %s209
      %s211 = sshll.u32 [#allocation9], 4
      %s212 = int_to_ptr.vmem [resolvable:$true] %s211
      %217 = dma.vmem_to_hbm [thread:$0]  %s212, 128, %s7, [#allocation5], 64, 64, 4
    $region45: #{tpu_custom_call.1} parent=1 // pred_fallthru
      _
    // Predicated region
    $region46: #{tpu_custom_call.1} parent=1 // pred_check
      _
    $region47: #{tpu_custom_call.1} parent=1 // pred_check_branch
      %219 = sbr.rel (0) target = $region49
    $region48: #{tpu_custom_call.1} parent=1 // pred_region
      %220 = dma.done [#allocation5], 128
    $region49: #{tpu_custom_call.1} parent=1 // pred_fallthru
      _
    %221 = vsyncpa [#allocation4], 1
    %222 = vsyncpa [#allocation7], 1
    %223 = vsyncpa [#allocation5], 1

// kernel: tpu_custom_call.1
$region0: #{tpu_custom_call.1}
  #allocation0 [shape = 'u32[]', space=smem, size = 0x4, offset = 0x4, fixed_abs, tag = 'smem constant byte address 0x4 - core index']
  #allocation1 [shape = 'u32[144,128]{1,0:T(1,128)}', space=vmem, size = 0x12000, scoped, tag = 'internal scratch']
  #allocation2 [shape = 'f32[1,1]{1,0:T(1,128)S(1)}', space=vmem, size = 0x200, scoped, tag = 'scoped memory for tpu_custom_call.1']
  %s0 = inlined_call_operand.hbm [shape: f32[16,32], index: 0, kind: input, shape index: {}]
  %s1 = inlined_call_operand.hbm [shape: bf16[32,32], index: 1, kind: input, shape index: {}]
  %s2 = inlined_call_operand.<no memory space> [shape: f32[1,1], index: 2, kind: input, shape index: {}]
  %s3 = inlined_call_operand.vmem [shape: f32[1,32], index: 3, kind: input, shape index: {}]
  %s4 = inlined_call_operand.hbm [shape: f32[16,32], index: 4, kind: input, shape index: {}]
  %s5 = inlined_call_operand.vmem [shape: f32[1,32], index: 5, kind: input, shape index: {}]
  %s6 = inlined_call_operand.vmem [shape: f32[1,32], index: 6, kind: input, shape index: {}]
  %s7 = inlined_call_operand.hbm [shape: bf16[16,32], index: 7, kind: output, shape index: {}]
  %s8 = sld [smem:[#allocation0]]
  $region50: #{tpu_custom_call.1} parent=0
    _
  %s10 = ssub.s32 1, %s8
  %s11 = scalar_select 0, %s10, %s8
  %v12 = vstv %s2
  %13 = vst [vmem:[#allocation2] sm:$0x1] %v12
  $region1: #{tpu_custom_call.1} parent=0
    #allocation3 [shape = 'u8[8192]{0}', space=vmem, size = 0x2000, scoped, tag = 'input window, operand 0, single buffered']
    #allocation4 [shape = 's32[1]{0}', space=sflag, size = 0x4, scoped, tag = 'scoped memory for tpu_custom_call.1']
    #allocation5 [shape = 's32[1]{0}', space=sflag, size = 0x4, scoped, tag = 'scoped memory for tpu_custom_call.1']
    #allocation6 [shape = 'u8[8192]{0}', space=vmem, size = 0x2000, scoped, tag = 'input window, operand 1, single buffered']
    #allocation7 [shape = 's32[1]{0}', space=sflag, size = 0x4, scoped, tag = 'scoped memory for tpu_custom_call.1']
    #allocation8 [shape = 'u8[8192]{0}', space=vmem, size = 0x2000, scoped, tag = 'input window, operand 4, single buffered']
    #allocation9 [shape = 'u8[4096]{0}', space=vmem, size = 0x1000, scoped, tag = 'output window, operand 0, single buffered']
    %14 = vsyncpa [#allocation4], 0
    %15 = vsyncpa [#allocation7], 0
    %16 = vsyncpa [#allocation5], 0
    // Predicated region
    $region2: #{tpu_custom_call.1} parent=1 // pred_check
      _
    $region3: #{tpu_custom_call.1} parent=1 // pred_check_branch
      %18 = sbr.rel (0) target = $region5
    $region4: #{tpu_custom_call.1} parent=1 // pred_region
      %s20 = ssub.s32 256, 256
      %21 = vsyncadd [#allocation4], %s20
      %s22 = sshll.u32 [#allocation3], 4
      %s23 = int_to_ptr.vmem [resolvable:$true] %s22
      %28 = dma.hbm_to_vmem [thread:$0]  %s0, 256, %s23, [#allocation4], 128, 128, 8
    $region5: #{tpu_custom_call.1} parent=1 // pred_fallthru
      _
    // Predicated region
    $region6: #{tpu_custom_call.1} parent=1 // pred_check
      _
    $region7: #{tpu_custom_call.1} parent=1 // pred_check_branch
      %30 = sbr.rel (0) target = $region9
    $region8: #{tpu_custom_call.1} parent=1 // pred_region
      %s32 = ssub.s32 256, 256
      %33 = vsyncadd [#allocation7], %s32
      %s34 = sshll.u32 [#allocation6], 4
      %s35 = int_to_ptr.vmem [resolvable:$true] %s34
      %40 = dma.hbm_to_vmem [thread:$0]  %s1, 256, %s35, [#allocation7], 64, 64, 4
    $region9: #{tpu_custom_call.1} parent=1 // pred_fallthru
      _
    // Predicated region
    $region10: #{tpu_custom_call.1} parent=1 // pred_check
      _
    $region11: #{tpu_custom_call.1} parent=1 // pred_check_branch
      %42 = sbr.rel (0) target = $region13
    $region12: #{tpu_custom_call.1} parent=1 // pred_region
      _
    $region13: #{tpu_custom_call.1} parent=1 // pred_fallthru
      _
    // Predicated region
    $region14: #{tpu_custom_call.1} parent=1 // pred_check
      _
    $region15: #{tpu_custom_call.1} parent=1 // pred_check_branch
      %44 = sbr.rel (0) target = $region17
    $region16: #{tpu_custom_call.1} parent=1 // pred_region
      _
    $region17: #{tpu_custom_call.1} parent=1 // pred_fallthru
      _
    // Predicated region
    $region18: #{tpu_custom_call.1} parent=1 // pred_check
      _
    $region19: #{tpu_custom_call.1} parent=1 // pred_check_branch
      %46 = sbr.rel (0) target = $region21
    $region20: #{tpu_custom_call.1} parent=1 // pred_region
      %s48 = ssub.s32 256, 256
      %49 = vsyncadd [#allocation7], %s48
      %s50 = sshll.u32 [#allocation8], 4
      %s51 = int_to_ptr.vmem [resolvable:$true] %s50
      %56 = dma.hbm_to_vmem [thread:$0]  %s4, 256, %s51, [#allocation7], 128, 128, 8
    $region21: #{tpu_custom_call.1} parent=1 // pred_fallthru
      _
    // Predicated region
    $region22: #{tpu_custom_call.1} parent=1 // pred_check
      _
    $region23: #{tpu_custom_call.1} parent=1 // pred_check_branch
      %58 = sbr.rel (0) target = $region25
    $region24: #{tpu_custom_call.1} parent=1 // pred_region
      _
    $region25: #{tpu_custom_call.1} parent=1 // pred_fallthru
      _
    // Predicated region
    $region26: #{tpu_custom_call.1} parent=1 // pred_check
      _
    $region27: #{tpu_custom_call.1} parent=1 // pred_check_branch
      %60 = sbr.rel (0) target = $region29
    $region28: #{tpu_custom_call.1} parent=1 // pred_region
      _
    $region29: #{tpu_custom_call.1} parent=1 // pred_fallthru
      _
    // Predicated region
    $region30: #{tpu_custom_call.1} parent=1 // pred_check
      _
    $region31: #{tpu_custom_call.1} parent=1 // pred_check_branch
      %62 = sbr.rel (0) target = $region33
    $region32: #{tpu_custom_call.1} parent=1 // pred_region
      %63 = dma.done [#allocation4], 256
    $region33: #{tpu_custom_call.1} parent=1 // pred_fallthru
      _
    // Predicated region
    $region34: #{tpu_custom_call.1} parent=1 // pred_check
      _
    $region35: #{tpu_custom_call.1} parent=1 // pred_check_branch
      %65 = sbr.rel (0) target = $region37
    $region36: #{tpu_custom_call.1} parent=1 // pred_region
      %66 = dma.done [#allocation7], 256
    $region37: #{tpu_custom_call.1} parent=1 // pred_fallthru
      _
    // Predicated region
    $region38: #{tpu_custom_call.1} parent=1 // pred_check
      _
    $region39: #{tpu_custom_call.1} parent=1 // pred_check_branch
      %68 = sbr.rel (0) target = $region41
    $region40: #{tpu_custom_call.1} parent=1 // pred_region
      %69 = dma.done [#allocation7], 256
    $region41: #{tpu_custom_call.1} parent=1 // pred_fallthru
      _
    %v71 = vld [vmem:[#allocation3] sm:$0xff]
    %v72 = vld [vmem:[#allocation3 + $0x8] sm:$0xff]
    %v73 = vpack.c.bf16 %v72, %v71
    %v74 = vld [vmem:[#allocation6] sm:$0xf]
    %v75 = vld [vmem:[#allocation6 + $0x4] sm:$0xf]
    %v76 = vld [vmem:[#allocation6 + $0x8] sm:$0xf]
    %v77 = vld [vmem:[#allocation6 + $0xc] sm:$0xf]
    %v82 = vunpack.c.l.b16 %v74
    %v83 = vunpack.c.l.b16 %v75
    %v84 = vunpack.c.l.b16 %v76
    %v85 = vunpack.c.l.b16 %v77
    %v86 = vpack.c.b16 %v83, %v82
    %v87 = vpack.c.b16 %v85, %v84
    %vm90 = vcmask 261120
    %v92 = vsel %vm90, %v73, 0
    %94 = vmatprep.subr.bf16.mxu0 0
    %95 = vmatpush1.bf16.msra.mxu0 %v86
    %96 = vmatprep.subr.bf16.mxu0 0
    %97 = vmatpush1.bf16.msra.mxu0 %v87
    %98 = vmatprep.subr.bf16.mxu0 0
    %99 = vmatpush1.bf16.msra.mxu0 0
    %100 = vmatprep.subr.bf16.mxu0 0
    %101 = vmatpush1.bf16.msra.mxu0 0
    %102 = vmatprep.subr.bf16.mxu0 0
    %103 = vmatpush1.bf16.msra.mxu0 0
    %104 = vmatprep.subr.bf16.mxu0 0
    %105 = vmatpush1.bf16.msra.mxu0 0
    %106 = vmatprep.subr.bf16.mxu0 0
    %107 = vmatpush1.bf16.msra.mxu0 0
    %108 = vmatprep.subr.bf16.mxu0 0
    %109 = vmatpush1.bf16.msra.mxu0 0
    %110 = vmatprep.subr.bf16.mxu0 0
    %111 = vmatpush1.bf16.msra.mxu0 0
    %112 = vmatprep.subr.bf16.mxu0 0
    %113 = vmatpush1.bf16.msra.mxu0 0
    %114 = vmatprep.subr.bf16.mxu0 0
    %115 = vmatpush1.bf16.msra.mxu0 0
    %116 = vmatprep.subr.bf16.mxu0 0
    %117 = vmatpush1.bf16.msra.mxu0 0
    %118 = vmatprep.subr.bf16.mxu0 0
    %119 = vmatpush1.bf16.msra.mxu0 0
    %120 = vmatprep.subr.bf16.mxu0 0
    %121 = vmatpush1.bf16.msra.mxu0 0
    %122 = vmatprep.subr.bf16.mxu0 0
    %123 = vmatpush1.bf16.msra.mxu0 0
    %124 = vmatprep.subr.bf16.mxu0 0
    %125 = vmatpush1.bf16.msra.mxu0 0
    %126 = vmatprep.mubr.bf16.mxu0 0
    %127 = vmatmul.mubr.bf16.gmra.mrb[0].mxu0 %v92
    %v128 = vpop.f32.mrb[0].mxu0
    %v129 = vadd.f32 0.0, %v128
    %v130 = vpop.f32.mrb[0].mxu0
    %v131 = vpop.f32.mrb[0].mxu0
    %v132 = vadd.f32 0.0, %v131
    %v133 = vpop.f32.mrb[0].mxu0
    %134 = vdwg.mxu0
    %v135 = vld [vmem:[#allocation2] sm:$0x1]
    %s136 = vtos %v135
    %v137 = vstv %s136
    %v138 = vmul.f32 %v129, %v137
    %v139 = vmul.f32 %v132, %v137
    %v140 = vld [vmem:[%s3] sm:$0x1]
    %v142 = vlaneseq
    %v143 = vshrl.u32 %v142, 7
    %v144 = vsub.s32 0, %v143
    %v145 = vrot.slane %v140, %v144
    %v147 = vadd.f32 %v138, %v145
    %v148 = vadd.f32 %v139, %v145
    %v149 = vld [vmem:[#allocation8] sm:$0xff]
    %v150 = vld [vmem:[#allocation8 + $0x8] sm:$0xff]
    %v151 = vadd.f32 %v147, %v149
    %v152 = vadd.f32 %v148, %v150
    %v153 = vsel %vm90, %v151, 0.0
    %154 = vadd.xlane.f32.xlu0 %v153
    %v155 = vpop.xlane.xlu0 %154
    %v156 = vsel %vm90, %v152, 0.0
    %157 = vadd.xlane.f32.xlu0 %v156
    %v158 = vpop.xlane.xlu0 %157
    %v159 = vmul.f32 %v155, 0.03125
    %v160 = vmul.f32 %v158, 0.03125
    %v161 = vsub.f32 %v151, %v159
    %v162 = vsub.f32 %v152, %v160
    %v163 = vmul.f32 %v161, %v161
    %v164 = vmul.f32 %v162, %v162
    %v165 = vsel %vm90, %v163, 0.0
    %166 = vadd.xlane.f32.xlu0 %v165
    %v167 = vpop.xlane.xlu0 %166
    %v168 = vsel %vm90, %v164, 0.0
    %169 = vadd.xlane.f32.xlu0 %v168
    %v170 = vpop.xlane.xlu0 %169
    %v171 = vmul.f32 %v167, 0.03125
    %v172 = vmul.f32 %v170, 0.03125
    %v173 = vadd.f32 %v171, 1e-12
    %v174 = vadd.f32 %v172, 1e-12
    %v175 = vrsqrt.pop %v173
    %v176 = vrsqrt.pop %v174
    %v177 = vmul.f32 %v161, %v175
    %v178 = vmul.f32 %v162, %v176
    %v179 = vld [vmem:[%s5] sm:$0x1]
    %v181 = vlaneseq
    %v182 = vshrl.u32 %v181, 7
    %v183 = vsub.s32 0, %v182
    %v184 = vrot.slane %v179, %v183
    %v186 = vmul.f32 %v177, %v184
    %v187 = vmul.f32 %v178, %v184
    %v188 = vld [vmem:[%s6] sm:$0x1]
    %v190 = vlaneseq
    %v191 = vshrl.u32 %v190, 7
    %v192 = vsub.s32 0, %v191
    %v193 = vrot.slane %v188, %v192
    %v195 = vadd.f32 %v186, %v193
    %v196 = vadd.f32 %v187, %v193
    %v197 = vpack.c.bf16 %v196, %v195
    %v199 = vunpack.c.l.b16 %v197
    %v200 = vunpack.c.h.b16 %v197
    %v201 = vpack.c.b16 %v199, %v199
    %v202 = vpack.c.b16 %v200, %v200
    %vm205 = vcmask 257024
    %206 = vst.msk [vmem:[#allocation9] sm:$0xf] %vm205, %v201
    %207 = vst.msk [vmem:[#allocation9 + $0x4] sm:$0xf] %vm205, %v202
    // Predicated region
    $region42: #{tpu_custom_call.1} parent=1 // pred_check
      _
    $region43: #{tpu_custom_call.1} parent=1 // pred_check_branch
      %209 = sbr.rel (0) target = $region45
    $region44: #{tpu_custom_call.1} parent=1 // pred_region
      %s211 = ssub.s32 128, 128
      %212 = vsyncadd [#allocation5], %s211
      %s213 = sshll.u32 [#allocation9], 4
      %s214 = int_to_ptr.vmem [resolvable:$true] %s213
      %219 = dma.vmem_to_hbm [thread:$0]  %s214, 128, %s7, [#allocation5], 64, 64, 4
    $region45: #{tpu_custom_call.1} parent=1 // pred_fallthru
      _
    // Predicated region
    $region46: #{tpu_custom_call.1} parent=1 // pred_check
      _
    $region47: #{tpu_custom_call.1} parent=1 // pred_check_branch
      %221 = sbr.rel (0) target = $region49
    $region48: #{tpu_custom_call.1} parent=1 // pred_region
      %222 = dma.done [#allocation5], 128
    $region49: #{tpu_custom_call.1} parent=1 // pred_fallthru
      _
    %223 = vsyncpa [#allocation4], 1
    %224 = vsyncpa [#allocation7], 1
    %225 = vsyncpa [#allocation5], 1

</llo_original>
